<compile_context>
chip_gen: v5e
topology: v5e:2x2
jax: 0.10.0
libtpu: 0.0.40
codegen_flags: <defaults>
</compile_context>

<pallas_src>
import jax
import jax.numpy as jnp
from jax import lax
from jax.experimental import pallas as pl
from jax.experimental.pallas import tpu as pltpu

INP_DIM = 32       # environment observation dim (synthetic)
HIDDEN = 128
N_ACTIONS = 8      # synthetic action count
BATCH = 2
LANES = 128        # lane-padded feature / head width


def _round_up(a, b):
    return ((a + b - 1) // b) * b


def policy_kernel(x_ref, w1_ref, b1_ref, wh_ref, bh_ref, out_ref):
    # Hidden layer: Linear + ReLU (MXU matmul, f32 accumulation).
    h = jnp.dot(x_ref[...], w1_ref[...], preferred_element_type=jnp.float32)
    h = jnp.maximum(h + b1_ref[...], 0.0)

    # Fused heads: one lane-padded matmul.
    #   column j < N_ACTIONS : actor logit j
    #   column j == N_ACTIONS: critic value
    #   column j > N_ACTIONS : zero padding (zero weights + zero bias)
    z = jnp.dot(h, wh_ref[...], preferred_element_type=jnp.float32) + bh_ref[...]

    col = lax.broadcasted_iota(jnp.int32, z.shape, 1)
    neg_inf = jnp.float32(-jnp.inf)

    # Numerically-stable softmax over the first N_ACTIONS lanes only.
    logits = jnp.where(col < N_ACTIONS, z, neg_inf)
    m = jnp.max(logits, axis=-1, keepdims=True)
    e = jnp.exp(logits - m)                       # masked lanes -> exp(-inf) = 0
    denom = jnp.sum(e, axis=-1, keepdims=True)
    inv = pl.reciprocal(denom, approx=True)       # EUP vrcp (free slot)
    inv = inv * (2.0 - denom * inv)               # one Newton step -> ~f32 accuracy
    probs = e * inv

    # Lane-dense combined output: probs in lanes [0, N_ACTIONS), value in lane
    # N_ACTIONS, zeros elsewhere. Single unmasked store.
    out = probs + jnp.where(col == N_ACTIONS, z, 0.0)
    out_ref[...] = out.astype(out_ref.dtype)


def policy_forward(x, w1, b1, wa, ba, wv, bv, *, block_b=512):
    """x: [B, INP_DIM] f32. Weights stored as [in, out] (transpose of PyTorch)."""
    B, d_in = x.shape
    assert d_in == INP_DIM

    # --- wrapper-side layout plumbing (all zero padding, numerically free) ---
    # Pad features to a full 128-lane K dimension.
    x_p = jnp.pad(x, ((0, 0), (0, LANES - d_in)))
    w1_p = jnp.pad(w1, ((0, LANES - d_in), (0, 0)))           # (128, 128)

    # Fuse actor + critic heads into one lane-padded weight / bias.
    wh = jnp.concatenate([wa, wv], axis=1)                    # (128, N_ACTIONS+1)
    wh = jnp.pad(wh, ((0, 0), (0, LANES - wh.shape[1])))      # (128, 128)
    bh = jnp.concatenate([ba, bv], axis=1)                    # (1, N_ACTIONS+1)
    bh = jnp.pad(bh, ((0, 0), (0, LANES - bh.shape[1])))      # (1, 128)

    # Batch tiling: multiple of 8 sublanes, capped at block_b rows per tile
    # (512 rows * 128 lanes * 4B = 256 KiB/tile -> comfortably inside the
    # 32 MiB scoped VMEM limit on v7x even with double buffering).
    tb = min(block_b, _round_up(B, 8))
    B_pad = _round_up(B, tb)
    if B_pad != B:
        x_p = jnp.pad(x_p, ((0, B_pad - B), (0, 0)))
    grid = (B_pad // tb,)

    out = pl.pallas_call(
        policy_kernel,
        out_shape=jax.ShapeDtypeStruct((B_pad, LANES), jnp.float32),
        grid=grid,
        in_specs=[
            pl.BlockSpec((tb, LANES), lambda i: (i, 0)),       # x tile
            pl.BlockSpec((LANES, HIDDEN), lambda i: (0, 0)),   # w1 (resident)
            pl.BlockSpec((1, HIDDEN), lambda i: (0, 0)),       # b1
            pl.BlockSpec((HIDDEN, LANES), lambda i: (0, 0)),   # fused head weight
            pl.BlockSpec((1, LANES), lambda i: (0, 0)),        # fused head bias
        ],
        out_specs=pl.BlockSpec((tb, LANES), lambda i: (i, 0)),
        compiler_params=pltpu.CompilerParams(
            dimension_semantics=("parallel",)),                # v7x: 2 TCs
    )(x_p, w1_p, b1, wh, bh)

    probs = out[:B, :N_ACTIONS]
    values = out[:B, N_ACTIONS:N_ACTIONS + 1]
    return probs, values


def init_params(key):
    """Deterministic init mimicking nn.Linear default (uniform +-1/sqrt(fan_in)).
    Weights are stored as [in, out] (transpose of PyTorch's [out, in])."""
    k1, k2, k3, k4, k5, k6 = jax.random.split(key, 6)

    def lin(kw, kb, fan_in, fan_out):
        bound = 1.0 / jnp.sqrt(fan_in)
        w = jax.random.uniform(kw, (fan_in, fan_out), jnp.float32, -bound, bound)
        b = jax.random.uniform(kb, (1, fan_out), jnp.float32, -bound, bound)
        return w, b

    w1, b1 = lin(k1, k2, INP_DIM, HIDDEN)
    wa, ba = lin(k3, k4, HIDDEN, N_ACTIONS)
    wv, bv = lin(k5, k6, HIDDEN, 1)
    return w1, b1, wa, ba, wv, bv


def reference_forward(x, w1, b1, wa, ba, wv, bv):
    h = jnp.maximum(x @ w1 + b1, 0.0)
    probs = jax.nn.softmax(h @ wa + ba, axis=-1)
    values = h @ wv + bv
    return probs, values


if __name__ == "__main__":
    key = jax.random.PRNGKey(0)
    kx, kp = jax.random.split(key)
    x = jax.random.normal(kx, (BATCH, INP_DIM), jnp.float32)
    params = init_params(kp)

    probs, values = policy_forward(x, *params)
    jax.block_until_ready((probs, values))

    # sanity check against pure-JAX reference
    ref_probs, ref_values = reference_forward(x, *params)
    assert probs.shape == (BATCH, N_ACTIONS)
    assert values.shape == (BATCH, 1)
    assert jnp.allclose(probs, ref_probs, atol=1e-5, rtol=1e-5)
    assert jnp.allclose(values, ref_values, atol=1e-5, rtol=1e-5)
    assert jnp.allclose(jnp.sum(probs, axis=-1), 1.0, atol=1e-5)

    print("KERNEL_OK")
</pallas_src>

<mosaic_0001>
module attributes {stable_mosaic.version = 11 : i64} {
  func.func @policy_kernel(%arg0: i32, %arg1: memref<8x128xf32, #tpu.memory_space<vmem>>, %arg2: memref<128x128xf32, #tpu.memory_space<vmem>>, %arg3: memref<1x128xf32, #tpu.memory_space<vmem>>, %arg4: memref<128x128xf32, #tpu.memory_space<vmem>>, %arg5: memref<1x128xf32, #tpu.memory_space<vmem>>, %arg6: memref<8x128xf32, #tpu.memory_space<vmem>>) attributes {dimension_semantics = [#tpu.dimension_semantics<parallel>], iteration_bounds = array<i64: 1>, scalar_prefetch = 0 : i64, scratch_operands = 0 : i64, tpu.core_type = #tpu.core_type<tc>, window_params = [{transform_indices = @transform_0, window_bounds = array<i64: 8, 128>}, {pipeline_mode = #tpu.pipeline_mode<synchronous>, transform_indices = @transform_1, window_bounds = array<i64: 128, 128>}, {pipeline_mode = #tpu.pipeline_mode<synchronous>, transform_indices = @transform_2, window_bounds = array<i64: 1, 128>}, {pipeline_mode = #tpu.pipeline_mode<synchronous>, transform_indices = @transform_3, window_bounds = array<i64: 128, 128>}, {pipeline_mode = #tpu.pipeline_mode<synchronous>, transform_indices = @transform_4, window_bounds = array<i64: 1, 128>}, {transform_indices = @transform_5, window_bounds = array<i64: 8, 128>}]} {
    %c0 = arith.constant 0 : index
    %c0_0 = arith.constant 0 : index
    %0 = vector.load %arg1[%c0, %c0_0] : memref<8x128xf32, #tpu.memory_space<vmem>>, vector<8x128xf32>
    %c0_1 = arith.constant 0 : index
    %c0_2 = arith.constant 0 : index
    %1 = vector.load %arg2[%c0_1, %c0_2] : memref<128x128xf32, #tpu.memory_space<vmem>>, vector<128x128xf32>
    %cst = arith.constant dense<0.000000e+00> : vector<8x128xf32>
    %2 = tpu.matmul %0, %1, %cst {dimension_numbers = #tpu.dot_dimension_numbers<[1], [0], [0], [1], [0, 0, 1, 1], [], []>} : vector<8x128xf32>, vector<128x128xf32>, vector<8x128xf32> -> vector<8x128xf32>
    %c0_3 = arith.constant 0 : index
    %c0_4 = arith.constant 0 : index
    %3 = vector.load %arg3[%c0_3, %c0_4] : memref<1x128xf32, #tpu.memory_space<vmem>>, vector<1x128xf32>
    %4 = vector.broadcast %3 : vector<1x128xf32> to vector<8x128xf32>
    %5 = arith.addf %2, %4 : vector<8x128xf32>
    %cst_5 = arith.constant 0.000000e+00 : f32
    %6 = vector.broadcast %cst_5 : f32 to vector<8x128xf32>
    %7 = arith.maximumf %5, %6 : vector<8x128xf32>
    %c0_6 = arith.constant 0 : index
    %c0_7 = arith.constant 0 : index
    %8 = vector.load %arg4[%c0_6, %c0_7] : memref<128x128xf32, #tpu.memory_space<vmem>>, vector<128x128xf32>
    %cst_8 = arith.constant dense<0.000000e+00> : vector<8x128xf32>
    %9 = tpu.matmul %7, %8, %cst_8 {dimension_numbers = #tpu.dot_dimension_numbers<[1], [0], [0], [1], [0, 0, 1, 1], [], []>} : vector<8x128xf32>, vector<128x128xf32>, vector<8x128xf32> -> vector<8x128xf32>
    %c0_9 = arith.constant 0 : index
    %c0_10 = arith.constant 0 : index
    %10 = vector.load %arg5[%c0_9, %c0_10] : memref<1x128xf32, #tpu.memory_space<vmem>>, vector<1x128xf32>
    %11 = vector.broadcast %10 : vector<1x128xf32> to vector<8x128xf32>
    %12 = arith.addf %9, %11 : vector<8x128xf32>
    %13 = tpu.iota {dimensions = array<i32: 1>} : vector<8x128xi32>
    %c8_i32 = arith.constant 8 : i32
    %14 = vector.broadcast %c8_i32 : i32 to vector<8x128xi32>
    %15 = arith.cmpi slt, %13, %14 : vector<8x128xi32>
    %cst_11 = arith.constant 0xFF800000 : f32
    %16 = vector.broadcast %cst_11 : f32 to vector<8x128xf32>
    %17 = arith.select %15, %12, %16 : vector<8x128xi1>, vector<8x128xf32>
    %cst_12 = arith.constant dense<0xFF800000> : vector<8xf32>
    %18 = vector.multi_reduction <maximumf>, %17, %cst_12 [1] : vector<8x128xf32> to vector<8xf32>
    %19 = vector.shape_cast %18 : vector<8xf32> to vector<8x1xf32>
    %20 = vector.broadcast %19 : vector<8x1xf32> to vector<8x128xf32>
    %21 = arith.subf %17, %20 : vector<8x128xf32>
    %22 = math.exp %21 : vector<8x128xf32>
    %cst_13 = arith.constant dense<0.000000e+00> : vector<8xf32>
    %23 = vector.multi_reduction <add>, %22, %cst_13 [1] : vector<8x128xf32> to vector<8xf32>
    %24 = vector.shape_cast %23 : vector<8xf32> to vector<8x1xf32>
    %25 = tpu.reciprocal %24 {approx = true} : vector<8x1xf32> -> vector<8x1xf32>
    %26 = arith.mulf %24, %25 : vector<8x1xf32>
    %cst_14 = arith.constant 2.000000e+00 : f32
    %27 = vector.broadcast %cst_14 : f32 to vector<8x1xf32>
    %28 = arith.subf %27, %26 : vector<8x1xf32>
    %29 = arith.mulf %25, %28 : vector<8x1xf32>
    %30 = vector.broadcast %29 : vector<8x1xf32> to vector<8x128xf32>
    %31 = arith.mulf %22, %30 : vector<8x128xf32>
    %c8_i32_15 = arith.constant 8 : i32
    %32 = vector.broadcast %c8_i32_15 : i32 to vector<8x128xi32>
    %33 = arith.cmpi eq, %13, %32 : vector<8x128xi32>
    %cst_16 = arith.constant 0.000000e+00 : f32
    %34 = vector.broadcast %cst_16 : f32 to vector<8x128xf32>
    %35 = arith.select %33, %12, %34 : vector<8x128xi1>, vector<8x128xf32>
    %36 = arith.addf %31, %35 : vector<8x128xf32>
    %c0_17 = arith.constant 0 : index
    %c0_18 = arith.constant 0 : index
    %37 = vector.load %arg6[%c0_17, %c0_18] : memref<8x128xf32, #tpu.memory_space<vmem>>, vector<8x128xf32>
    tpu.vector_store %arg6[%c0_17, %c0_18], %36 {strides = array<i32>} : memref<8x128xf32, #tpu.memory_space<vmem>>, vector<8x128xf32>,
    return
  }
  func.func @transform_0(%arg0: i32) -> (i32, i32) {
    %c0_i32 = arith.constant 0 : i32
    %c0_i32_0 = arith.constant 0 : i32
    return %arg0, %c0_i32 : i32, i32
  }
  func.func @transform_1(%arg0: i32) -> (i32, i32) {
    %c0_i32 = arith.constant 0 : i32
    %c0_i32_0 = arith.constant 0 : i32
    %c0_i32_1 = arith.constant 0 : i32
    return %c0_i32, %c0_i32_0 : i32, i32
  }
  func.func @transform_2(%arg0: i32) -> (i32, i32) {
    %c0_i32 = arith.constant 0 : i32
    %c0_i32_0 = arith.constant 0 : i32
    %c0_i32_1 = arith.constant 0 : i32
    return %c0_i32, %c0_i32_0 : i32, i32
  }
  func.func @transform_3(%arg0: i32) -> (i32, i32) {
    %c0_i32 = arith.constant 0 : i32
    %c0_i32_0 = arith.constant 0 : i32
    %c0_i32_1 = arith.constant 0 : i32
    return %c0_i32, %c0_i32_0 : i32, i32
  }
  func.func @transform_4(%arg0: i32) -> (i32, i32) {
    %c0_i32 = arith.constant 0 : i32
    %c0_i32_0 = arith.constant 0 : i32
    %c0_i32_1 = arith.constant 0 : i32
    return %c0_i32, %c0_i32_0 : i32, i32
  }
  func.func @transform_5(%arg0: i32) -> (i32, i32) {
    %c0_i32 = arith.constant 0 : i32
    %c0_i32_0 = arith.constant 0 : i32
    return %arg0, %c0_i32 : i32, i32
  }
}

</mosaic_0001>

<llo_original>
// kernel: tpu_custom_call.1
$region0: #{tpu_custom_call.1}
  #allocation0 [shape = 'u32[]', space=smem, size = 0x4, offset = 0x4, fixed_abs, tag = 'smem constant byte address 0x4 - core index']
  #allocation1 [shape = 'u32[72,128]{1,0:T(1,128)}', space=vmem, size = 0x9000, scoped, tag = 'internal scratch']
  %s0 = inlined_call_operand.hbm [shape: f32[8,128], index: 0, kind: input, shape index: {}]
  %s1 = inlined_call_operand.hbm [shape: f32[128,128], index: 1, kind: input, shape index: {}]
  %s2 = inlined_call_operand.vmem [shape: f32[1,128], index: 2, kind: input, shape index: {}]
  %s3 = inlined_call_operand.hbm [shape: f32[128,128], index: 3, kind: input, shape index: {}]
  %s4 = inlined_call_operand.vmem [shape: f32[1,128], index: 4, kind: input, shape index: {}]
  %s5 = inlined_call_operand.hbm [shape: f32[8,128], index: 5, kind: output, shape index: {}]
  %s6 = sld [smem:[#allocation0]]
  $region42: #{tpu_custom_call.1} parent=0
    _
  %s8 = ssub.s32 1, %s6
  %s9 = scalar_select 0, %s8, %s6
  $region1: #{tpu_custom_call.1} parent=0
    #allocation2 [shape = 'u8[4096]{0}', space=vmem, size = 0x1000, scoped, tag = 'input window, operand 0, single buffered']
    #allocation3 [shape = 's32[1]{0}', space=sflag, size = 0x4, scoped, tag = 'scoped memory for tpu_custom_call.1']
    #allocation4 [shape = 's32[1]{0}', space=sflag, size = 0x4, scoped, tag = 'scoped memory for tpu_custom_call.1']
    #allocation5 [shape = 'u8[65536]{0}', space=vmem, size = 0x10000, scoped, tag = 'input window, operand 1, single buffered']
    #allocation6 [shape = 's32[1]{0}', space=sflag, size = 0x4, scoped, tag = 'scoped memory for tpu_custom_call.1']
    #allocation7 [shape = 'u8[65536]{0}', space=vmem, size = 0x10000, scoped, tag = 'input window, operand 3, single buffered']
    #allocation8 [shape = 'u8[4096]{0}', space=vmem, size = 0x1000, scoped, tag = 'output window, operand 0, single buffered']
    %10 = vsyncpa [#allocation3], 0
    %11 = vsyncpa [#allocation6], 0
    %12 = vsyncpa [#allocation4], 0
    // Predicated region
    $region2: #{tpu_custom_call.1} parent=1 // pred_check
      _
    $region3: #{tpu_custom_call.1} parent=1 // pred_check_branch
      %14 = sbr.rel (0) target = $region5
    $region4: #{tpu_custom_call.1} parent=1 // pred_region
      %16 = vsyncadd [#allocation3], 0
      %s18 = sshll.u32 %s0, 4
      %s19 = int_to_ptr.hbm [resolvable:$true] %s18
      %s20 = sshll.u32 [#allocation2], 4
      %s21 = int_to_ptr.vmem [resolvable:$true] %s20
      %23 = dma.hbm_to_vmem [thread:$0]  %s19, 128, %s21, [#allocation3]
    $region5: #{tpu_custom_call.1} parent=1 // pred_fallthru
      _
    // Predicated region
    $region6: #{tpu_custom_call.1} parent=1 // pred_check
      _
    $region7: #{tpu_custom_call.1} parent=1 // pred_check_branch
      %25 = sbr.rel (0) target = $region9
    $region8: #{tpu_custom_call.1} parent=1 // pred_region
      %27 = vsyncadd [#allocation6], 0
      %s28 = sshll.u32 %s1, 4
      %s29 = int_to_ptr.hbm [resolvable:$true] %s28
      %s30 = sshll.u32 [#allocation5], 4
      %s31 = int_to_ptr.vmem [resolvable:$true] %s30
      %36 = dma.hbm_to_vmem [thread:$0]  %s29, 2048, %s31, [#allocation6], 128, 128, 8
    $region9: #{tpu_custom_call.1} parent=1 // pred_fallthru
      _
    // Predicated region
    $region10: #{tpu_custom_call.1} parent=1 // pred_check
      _
    $region11: #{tpu_custom_call.1} parent=1 // pred_check_branch
      %38 = sbr.rel (0) target = $region13
    $region12: #{tpu_custom_call.1} parent=1 // pred_region
      _
    $region13: #{tpu_custom_call.1} parent=1 // pred_fallthru
      _
    // Predicated region
    $region14: #{tpu_custom_call.1} parent=1 // pred_check
      _
    $region15: #{tpu_custom_call.1} parent=1 // pred_check_branch
      %40 = sbr.rel (0) target = $region17
    $region16: #{tpu_custom_call.1} parent=1 // pred_region
      %42 = vsyncadd [#allocation6], 0
      %s43 = sshll.u32 %s3, 4
      %s44 = int_to_ptr.hbm [resolvable:$true] %s43
      %s45 = sshll.u32 [#allocation7], 4
      %s46 = int_to_ptr.vmem [resolvable:$true] %s45
      %51 = dma.hbm_to_vmem [thread:$0]  %s44, 2048, %s46, [#allocation6], 128, 128, 8
    $region17: #{tpu_custom_call.1} parent=1 // pred_fallthru
      _
    // Predicated region
    $region18: #{tpu_custom_call.1} parent=1 // pred_check
      _
    $region19: #{tpu_custom_call.1} parent=1 // pred_check_branch
      %53 = sbr.rel (0) target = $region21
    $region20: #{tpu_custom_call.1} parent=1 // pred_region
      _
    $region21: #{tpu_custom_call.1} parent=1 // pred_fallthru
      _
    // Predicated region
    $region22: #{tpu_custom_call.1} parent=1 // pred_check
      _
    $region23: #{tpu_custom_call.1} parent=1 // pred_check_branch
      %55 = sbr.rel (0) target = $region25
    $region24: #{tpu_custom_call.1} parent=1 // pred_region
      %57 = dma.done [#allocation3], 128
    $region25: #{tpu_custom_call.1} parent=1 // pred_fallthru
      _
    // Predicated region
    $region26: #{tpu_custom_call.1} parent=1 // pred_check
      _
    $region27: #{tpu_custom_call.1} parent=1 // pred_check_branch
      %59 = sbr.rel (0) target = $region29
    $region28: #{tpu_custom_call.1} parent=1 // pred_region
      %61 = dma.done [#allocation6], 2048
    $region29: #{tpu_custom_call.1} parent=1 // pred_fallthru
      _
    // Predicated region
    $region30: #{tpu_custom_call.1} parent=1 // pred_check
      _
    $region31: #{tpu_custom_call.1} parent=1 // pred_check_branch
      %63 = sbr.rel (0) target = $region33
    $region32: #{tpu_custom_call.1} parent=1 // pred_region
      %65 = dma.done [#allocation6], 2048
    $region33: #{tpu_custom_call.1} parent=1 // pred_fallthru
      _
    %v66 = vld [vmem:[#allocation2] sm:$0xff]
    %v67 = vld [vmem:[#allocation5] sm:$0xff]
    %v68 = vld [vmem:[#allocation5 + $0x8] sm:$0xff]
    %v69 = vld [vmem:[#allocation5 + $0x10] sm:$0xff]
    %v70 = vld [vmem:[#allocation5 + $0x18] sm:$0xff]
    %v71 = vld [vmem:[#allocation5 + $0x20] sm:$0xff]
    %v72 = vld [vmem:[#allocation5 + $0x28] sm:$0xff]
    %v73 = vld [vmem:[#allocation5 + $0x30] sm:$0xff]
    %v74 = vld [vmem:[#allocation5 + $0x38] sm:$0xff]
    %v75 = vld [vmem:[#allocation5 + $0x40] sm:$0xff]
    %v76 = vld [vmem:[#allocation5 + $0x48] sm:$0xff]
    %v77 = vld [vmem:[#allocation5 + $0x50] sm:$0xff]
    %v78 = vld [vmem:[#allocation5 + $0x58] sm:$0xff]
    %v79 = vld [vmem:[#allocation5 + $0x60] sm:$0xff]
    %v80 = vld [vmem:[#allocation5 + $0x68] sm:$0xff]
    %v81 = vld [vmem:[#allocation5 + $0x70] sm:$0xff]
    %v82 = vld [vmem:[#allocation5 + $0x78] sm:$0xff]
    %v83 = vld [vmem:[%s2] sm:$0x1]
    %v85 = vperm.slane %v83, 0
    %87 = vmatpush.msra.mxu0 %v82
    %88 = vmatpush.msra.mxu0 %v81
    %89 = vmatpush.msra.mxu0 %v80
    %90 = vmatpush.msra.mxu0 %v79
    %91 = vmatpush.msra.mxu0 %v78
    %92 = vmatpush.msra.mxu0 %v77
    %93 = vmatpush.msra.mxu0 %v76
    %94 = vmatpush.msra.mxu0 %v75
    %95 = vmatpush.msra.mxu0 %v74
    %96 = vmatpush.msra.mxu0 %v73
    %97 = vmatpush.msra.mxu0 %v72
    %98 = vmatpush.msra.mxu0 %v71
    %99 = vmatpush.msra.mxu0 %v70
    %100 = vmatpush.msra.mxu0 %v69
    %101 = vmatpush.msra.mxu0 %v68
    %102 = vmatpush.msra.mxu0 %v67
    %103 = vmatmul.f32.gmra.mxu0 %v66
    %v104 = vpop.f32.mrf.mxu0
    %v105 = vadd.f32 %v85, %v104
    %106 = vdwg.mxu0
    %v107 = vmax.f32 %v105, 0.0
    %v108 = vld [vmem:[#allocation7] sm:$0xff]
    %v109 = vld [vmem:[#allocation7 + $0x8] sm:$0xff]
    %v110 = vld [vmem:[#allocation7 + $0x10] sm:$0xff]
    %v111 = vld [vmem:[#allocation7 + $0x18] sm:$0xff]
    %v112 = vld [vmem:[#allocation7 + $0x20] sm:$0xff]
    %v113 = vld [vmem:[#allocation7 + $0x28] sm:$0xff]
    %v114 = vld [vmem:[#allocation7 + $0x30] sm:$0xff]
    %v115 = vld [vmem:[#allocation7 + $0x38] sm:$0xff]
    %v116 = vld [vmem:[#allocation7 + $0x40] sm:$0xff]
    %v117 = vld [vmem:[#allocation7 + $0x48] sm:$0xff]
    %v118 = vld [vmem:[#allocation7 + $0x50] sm:$0xff]
    %v119 = vld [vmem:[#allocation7 + $0x58] sm:$0xff]
    %v120 = vld [vmem:[#allocation7 + $0x60] sm:$0xff]
    %v121 = vld [vmem:[#allocation7 + $0x68] sm:$0xff]
    %v122 = vld [vmem:[#allocation7 + $0x70] sm:$0xff]
    %v123 = vld [vmem:[#allocation7 + $0x78] sm:$0xff]
    %v124 = vld [vmem:[%s4] sm:$0x1]
    %v126 = vperm.slane %v124, 0
    %128 = vmatpush.msra.mxu0 %v123
    %129 = vmatpush.msra.mxu0 %v122
    %130 = vmatpush.msra.mxu0 %v121
    %131 = vmatpush.msra.mxu0 %v120
    %132 = vmatpush.msra.mxu0 %v119
    %133 = vmatpush.msra.mxu0 %v118
    %134 = vmatpush.msra.mxu0 %v117
    %135 = vmatpush.msra.mxu0 %v116
    %136 = vmatpush.msra.mxu0 %v115
    %137 = vmatpush.msra.mxu0 %v114
    %138 = vmatpush.msra.mxu0 %v113
    %139 = vmatpush.msra.mxu0 %v112
    %140 = vmatpush.msra.mxu0 %v111
    %141 = vmatpush.msra.mxu0 %v110
    %142 = vmatpush.msra.mxu0 %v109
    %143 = vmatpush.msra.mxu0 %v108
    %144 = vmatmul.f32.gmra.mxu0 %v107
    %v145 = vpop.f32.mrf.mxu0
    %v146 = vadd.f32 %v126, %v145
    %147 = vdwg.mxu0
    %v148 = vlaneseq
    %v149 = vand.u32 %v148, 127
    %vm150 = vcmp.lt.s32.totalorder %v149, 8
    %v151 = vsel %vm150, %v146, -inf
    %152 = vmax.xlane.f32.xlu0 %v151
    %v153 = vpop.xlane.xlu0 %152
    %v154 = vsub.f32 %v151, %v153
    %v155 = vmul.f32 %v154, 1.442695
    %v156 = vpow.pop %v155
    %157 = vadd.xlane.f32.xlu0 %v156
    %v158 = vpop.xlane.xlu0 %157
    %v159 = vrcp.pop %v158
    %v160 = vmul.f32 %v158, %v159
    %v161 = vsub.f32 2.0, %v160
    %v162 = vmul.f32 %v159, %v161
    %v163 = vmul.f32 %v156, %v162
    %vm164 = vcmp.eq.s32.totalorder %v149, 8
    %v165 = vsel %vm164, %v146, 0.0
    %v166 = vadd.f32 %v163, %v165
    %167 = vst [vmem:[#allocation8] sm:$0xff] %v166
    // Predicated region
    $region34: #{tpu_custom_call.1} parent=1 // pred_check
      _
    $region35: #{tpu_custom_call.1} parent=1 // pred_check_branch
      %169 = sbr.rel (0) target = $region37
    $region36: #{tpu_custom_call.1} parent=1 // pred_region
      %171 = vsyncadd [#allocation4], 0
      %s173 = sshll.u32 [#allocation8], 4
      %s174 = int_to_ptr.vmem [resolvable:$true] %s173
      %s175 = sshll.u32 %s5, 4
      %s176 = int_to_ptr.hbm [resolvable:$true] %s175
      %178 = dma.vmem_to_hbm [thread:$0]  %s174, 128, %s176, [#allocation4]
    $region37: #{tpu_custom_call.1} parent=1 // pred_fallthru
      _
    // Predicated region
    $region38: #{tpu_custom_call.1} parent=1 // pred_check
      _
    $region39: #{tpu_custom_call.1} parent=1 // pred_check_branch
      %180 = sbr.rel (0) target = $region41
    $region40: #{tpu_custom_call.1} parent=1 // pred_region
      %182 = dma.done [#allocation4], 128
    $region41: #{tpu_custom_call.1} parent=1 // pred_fallthru
      _
    %183 = vsyncpa [#allocation3], 1
    %184 = vsyncpa [#allocation6], 1
    %185 = vsyncpa [#allocation4], 1

</llo_original>
